<compile_context>
chip_gen: v5e
topology: v5e:2x2
jax: 0.10.0
libtpu: 0.0.40
codegen_flags: <defaults>
</compile_context>

<pallas_src>
import functools
import math

import jax
import jax.numpy as jnp
from jax.experimental import pallas as pl
from jax.experimental.pallas import tpu as pltpu


_LANE = 128
_DESIRED_TILE_ROWS = 1024               # 1024 x 128 x 4B = 512 KiB f32 block
_VMEM_BLOCK_BUDGET = 24 * 1024 * 1024   # for all double-buffered blocks
_VMEM_LIMIT_BYTES = 32 * 1024 * 1024


def _round_up(x, m):
    return ((x + m - 1) // m) * m


def _sublane_multiple(dtype):
    """Sublane packing multiple: 8 for 4-byte, 16 for 2-byte, 32 for 1-byte."""
    itemsize = jnp.dtype(dtype).itemsize
    return 8 * max(1, 4 // max(1, itemsize))


def _make_mask_kernel(num_arrays):
    """Kernel over refs: x_0..x_{n-1}, mask_0..mask_{n-1}, out_0..out_{n-1}."""
    def kernel(*refs):
        xs = refs[:num_arrays]
        ms = refs[num_arrays:2 * num_arrays]
        outs = refs[2 * num_arrays:]
        for x_ref, m_ref, o_ref in zip(xs, ms, outs):
            # (tile_rows, lane) * (tile_rows, 1) broadcast rides the VPU slot.
            o_ref[...] = x_ref[...] * m_ref[...]
    return kernel


def masked_scale_rows(xs, masks, *, desired_tile_rows=_DESIRED_TILE_ROWS):
    """xs: list of [rows, lane] arrays (same rows/lane/dtype); masks: list of
    [rows, 1] arrays in xs dtype. Returns list of xs[i] * masks[i]."""
    num = len(xs)
    rows, lane = xs[0].shape
    dtype = xs[0].dtype
    itemsize = jnp.dtype(dtype).itemsize
    packing = _sublane_multiple(dtype)

    # Pick the largest lane/sublane-dense tile that fits the VMEM budget with
    # double-buffered in+out blocks for every fused operand.
    lane_eff = _round_up(lane, _LANE)                     # layout footprint
    per_block_budget = max(packing * lane_eff * itemsize,
                           _VMEM_BLOCK_BUDGET // (4 * num))
    tile_rows = min(desired_tile_rows,
                    per_block_budget // (lane_eff * itemsize))
    tile_rows = max(packing, (tile_rows // packing) * packing)
    if rows <= tile_rows:
        tile_rows = rows            # full-extent block along rows is always legal

    grid = (pl.cdiv(rows, tile_rows),)   # ragged tail handled by Pallas masking
    x_spec = pl.BlockSpec((tile_rows, lane), lambda i: (i, 0))
    m_spec = pl.BlockSpec((tile_rows, 1), lambda i: (i, 0))

    out_shape = tuple(jax.ShapeDtypeStruct((rows, lane), x.dtype) for x in xs)
    outs = pl.pallas_call(
        _make_mask_kernel(num),
        out_shape=out_shape,
        grid=grid,
        in_specs=[x_spec] * num + [m_spec] * num,
        out_specs=tuple([x_spec] * num),
        compiler_params=pltpu.CompilerParams(
            dimension_semantics=("parallel",),
            vmem_limit_bytes=_VMEM_LIMIT_BYTES,
        ),
    )(*xs, *masks)
    return list(outs)


# ---------------------------------------------------------------------------
# Glue: random miss-id generation (MissAugmenter.generate_random_miss_ids)
# ---------------------------------------------------------------------------
def generate_random_miss_ids(key, batch_size, num_sensors, stage="pretrain",
                             finetune_complete_prob=0.5):
    """Returns (avail[b, num_sensors] float mask, miss_count, miss_ids_sorted)."""
    num_miss_cases = num_sensors - 1
    if stage == "finetune":
        candidate_counts = jnp.arange(0, num_sensors)
        probs = jnp.concatenate([
            jnp.array([finetune_complete_prob], dtype=jnp.float32),
            jnp.full((num_miss_cases,),
                     (1.0 - finetune_complete_prob) / num_miss_cases,
                     dtype=jnp.float32),
        ])
    else:
        candidate_counts = jnp.arange(1, num_sensors)
        probs = jnp.full((num_miss_cases,), 1.0 / num_miss_cases,
                         dtype=jnp.float32)

    k_count, k_ids = jax.random.split(key)
    miss_count = jax.random.choice(k_count, candidate_counts, p=probs)

    # Per-sample missing ids: first `miss_count` entries of an independent
    # permutation of the sensor ids for each sample (vmapped, no unrolling).
    sample_keys = jax.random.split(k_ids, batch_size)
    perms = jax.vmap(
        lambda k: jax.random.permutation(k, num_sensors))(sample_keys)  # [B,S]
    inv = jnp.argsort(perms, axis=1)           # inv[b, mod] = rank of mod
    avail = (inv >= miss_count).astype(jnp.float32)   # 1 = available, 0 = miss

    # Sorted missing ids per sample, padded with sentinel `num_sensors`.
    sensor_ids = jnp.arange(num_sensors)
    miss_ids_sorted = jnp.sort(
        jnp.where(inv < miss_count, sensor_ids[None, :], num_sensors), axis=1)
    # TODO(synk): the CyclicAutoencoder branch (identical miss ids across the
    # batch) is not implemented; only the default per-sample path is.
    return avail, miss_count, miss_ids_sorted


# ---------------------------------------------------------------------------
# MissAugmenter.forward_input equivalent (whole forward jitted)
# ---------------------------------------------------------------------------
@functools.partial(jax.jit, static_argnames=("stage", "min_pallas_bytes"))
def miss_augmenter_forward(loc_input, key, stage="pretrain",
                           min_pallas_bytes=0):
    """loc_input: dict mod -> [b, c, i, s].  Returns (loc_output, gt, avail)."""
    mods = sorted(loc_input.keys())
    num_sensors = len(mods)
    batch_size = loc_input[mods[0]].shape[0]

    avail, miss_count, miss_ids = generate_random_miss_ids(
        key, batch_size, num_sensors, stage=stage)

    # Group equal-(shape, dtype) modalities so they fuse into ONE pallas_call
    # as separate in/out operands sharing the grid (no stack/split HBM passes).
    groups = {}
    for mod_id, m in enumerate(mods):
        x = loc_input[m]
        groups.setdefault((x.shape, jnp.dtype(x.dtype).name), []).append(
            (mod_id, m))

    loc_output = {}
    for (shape, _), members in groups.items():
        b = shape[0]
        f = math.prod(shape[1:]) if len(shape) > 1 else 1
        dtype = loc_input[members[0][1]].dtype
        itemsize = jnp.dtype(dtype).itemsize
        total_bytes = len(members) * b * f * itemsize

        if total_bytes < min_pallas_bytes:
            # Tiny tensors: XLA's fused broadcast-mul is already at roofline;
            # skip pallas_call launch/per-step overhead.
            for mod_id, m in members:
                bm = avail[:, mod_id].astype(dtype).reshape(
                    (b,) + (1,) * (len(shape) - 1))
                loc_output[m] = loc_input[m] * bm
            continue

        if f % _LANE == 0:
            # Lane-dense path: fold (batch, feature-rows) into one row axis so
            # blocks stay large even when per-sample F is small. Reshape of a
            # contiguous array is free.
            r = f // _LANE
            rows, lane = b * r, _LANE
            xs = [loc_input[m].reshape(rows, lane) for _, m in members]
            masks = [jnp.repeat(avail[:, mod_id].astype(dtype), r)[:, None]
                     for mod_id, _ in members]
        else:
            # F not a multiple of 128: use the full trailing dim as the block
            # (masked partial stores) rather than paying a jnp.pad HBM copy.
            rows, lane = b, f
            xs = [loc_input[m].reshape(rows, lane) for _, m in members]
            masks = [avail[:, mod_id].astype(dtype)[:, None]
                     for mod_id, _ in members]

        ys = masked_scale_rows(xs, masks)
        for (mod_id, m), y in zip(members, ys):
            loc_output[m] = y.reshape(shape)

    # TODO(synk): a donation-based variant (input_output_aliases) that only
    # DMA-zeros the missing (sample, modality) slices and skips available data
    # entirely would cut HBM traffic ~4x, but requires the caller to donate
    # loc_input; not implemented here.
    gt_miss_ids = (miss_ids, miss_count)
    return loc_output, gt_miss_ids, avail


if __name__ == "__main__":
    key = jax.random.PRNGKey(0)
    k_data, k_miss = jax.random.split(key)

    # Small deterministic inputs: 3 sensors/modalities, [b, c, i, s]=[2,4,16,16]
    num_sensors = 3
    b, c, i, s = 2, 4, 16, 16
    data_keys = jax.random.split(k_data, num_sensors)
    loc_input = {
        f"mod{m}": jax.random.normal(data_keys[m], (b, c, i, s),
                                     dtype=jnp.float32)
        for m in range(num_sensors)
    }

    loc_output, gt_miss_ids, avail = miss_augmenter_forward(
        loc_input, k_miss, stage="pretrain")
    jax.tree_util.tree_map(jax.block_until_ready, loc_output)

    # Reference check against plain JAX broadcasting (same key ordering).
    ok = True
    for mod_id, mod in enumerate(sorted(loc_input.keys())):
        ref = loc_input[mod] * avail[:, mod_id].reshape(b, 1, 1, 1)
        ok &= bool(jnp.allclose(loc_output[mod], ref))
    if not ok:
        raise SystemExit("mismatch vs reference")

    print("KERNEL_OK")
</pallas_src>

<mosaic_0001>
module attributes {stable_mosaic.version = 11 : i64} {
  func.func @kernel(%arg0: i32, %arg1: memref<16x128xf32, #tpu.memory_space<vmem>>, %arg2: memref<16x128xf32, #tpu.memory_space<vmem>>, %arg3: memref<16x128xf32, #tpu.memory_space<vmem>>, %arg4: memref<16x1xf32, #tpu.memory_space<vmem>>, %arg5: memref<16x1xf32, #tpu.memory_space<vmem>>, %arg6: memref<16x1xf32, #tpu.memory_space<vmem>>, %arg7: memref<16x128xf32, #tpu.memory_space<vmem>>, %arg8: memref<16x128xf32, #tpu.memory_space<vmem>>, %arg9: memref<16x128xf32, #tpu.memory_space<vmem>>) attributes {dimension_semantics = [#tpu.dimension_semantics<parallel>], iteration_bounds = array<i64: 1>, scalar_prefetch = 0 : i64, scratch_operands = 0 : i64, tpu.core_type = #tpu.core_type<tc>, window_params = [{transform_indices = @transform_0, window_bounds = array<i64: 16, 128>}, {transform_indices = @transform_1, window_bounds = array<i64: 16, 128>}, {transform_indices = @transform_2, window_bounds = array<i64: 16, 128>}, {transform_indices = @transform_3, window_bounds = array<i64: 16, 1>}, {transform_indices = @transform_4, window_bounds = array<i64: 16, 1>}, {transform_indices = @transform_5, window_bounds = array<i64: 16, 1>}, {transform_indices = @transform_6, window_bounds = array<i64: 16, 128>}, {transform_indices = @transform_7, window_bounds = array<i64: 16, 128>}, {transform_indices = @transform_8, window_bounds = array<i64: 16, 128>}]} {
    %c0 = arith.constant 0 : index
    %c0_0 = arith.constant 0 : index
    %0 = vector.load %arg1[%c0, %c0_0] : memref<16x128xf32, #tpu.memory_space<vmem>>, vector<16x128xf32>
    %c0_1 = arith.constant 0 : index
    %c0_2 = arith.constant 0 : index
    %1 = vector.load %arg4[%c0_1, %c0_2] : memref<16x1xf32, #tpu.memory_space<vmem>>, vector<16x1xf32>
    %2 = vector.broadcast %1 : vector<16x1xf32> to vector<16x128xf32>
    %3 = arith.mulf %0, %2 : vector<16x128xf32>
    %c0_3 = arith.constant 0 : index
    %c0_4 = arith.constant 0 : index
    %4 = vector.load %arg7[%c0_3, %c0_4] : memref<16x128xf32, #tpu.memory_space<vmem>>, vector<16x128xf32>
    tpu.vector_store %arg7[%c0_3, %c0_4], %3 {strides = array<i32>} : memref<16x128xf32, #tpu.memory_space<vmem>>, vector<16x128xf32>,
    %c0_5 = arith.constant 0 : index
    %c0_6 = arith.constant 0 : index
    %5 = vector.load %arg2[%c0_5, %c0_6] : memref<16x128xf32, #tpu.memory_space<vmem>>, vector<16x128xf32>
    %c0_7 = arith.constant 0 : index
    %c0_8 = arith.constant 0 : index
    %6 = vector.load %arg5[%c0_7, %c0_8] : memref<16x1xf32, #tpu.memory_space<vmem>>, vector<16x1xf32>
    %7 = vector.broadcast %6 : vector<16x1xf32> to vector<16x128xf32>
    %8 = arith.mulf %5, %7 : vector<16x128xf32>
    %c0_9 = arith.constant 0 : index
    %c0_10 = arith.constant 0 : index
    %9 = vector.load %arg8[%c0_9, %c0_10] : memref<16x128xf32, #tpu.memory_space<vmem>>, vector<16x128xf32>
    tpu.vector_store %arg8[%c0_9, %c0_10], %8 {strides = array<i32>} : memref<16x128xf32, #tpu.memory_space<vmem>>, vector<16x128xf32>,
    %c0_11 = arith.constant 0 : index
    %c0_12 = arith.constant 0 : index
    %10 = vector.load %arg3[%c0_11, %c0_12] : memref<16x128xf32, #tpu.memory_space<vmem>>, vector<16x128xf32>
    %c0_13 = arith.constant 0 : index
    %c0_14 = arith.constant 0 : index
    %11 = vector.load %arg6[%c0_13, %c0_14] : memref<16x1xf32, #tpu.memory_space<vmem>>, vector<16x1xf32>
    %12 = vector.broadcast %11 : vector<16x1xf32> to vector<16x128xf32>
    %13 = arith.mulf %10, %12 : vector<16x128xf32>
    %c0_15 = arith.constant 0 : index
    %c0_16 = arith.constant 0 : index
    %14 = vector.load %arg9[%c0_15, %c0_16] : memref<16x128xf32, #tpu.memory_space<vmem>>, vector<16x128xf32>
    tpu.vector_store %arg9[%c0_15, %c0_16], %13 {strides = array<i32>} : memref<16x128xf32, #tpu.memory_space<vmem>>, vector<16x128xf32>,
    return
  }
  func.func @transform_0(%arg0: i32) -> (i32, i32) {
    %c0_i32 = arith.constant 0 : i32
    %c0_i32_0 = arith.constant 0 : i32
    return %arg0, %c0_i32 : i32, i32
  }
  func.func @transform_1(%arg0: i32) -> (i32, i32) {
    %c0_i32 = arith.constant 0 : i32
    %c0_i32_0 = arith.constant 0 : i32
    return %arg0, %c0_i32 : i32, i32
  }
  func.func @transform_2(%arg0: i32) -> (i32, i32) {
    %c0_i32 = arith.constant 0 : i32
    %c0_i32_0 = arith.constant 0 : i32
    return %arg0, %c0_i32 : i32, i32
  }
  func.func @transform_3(%arg0: i32) -> (i32, i32) {
    %c0_i32 = arith.constant 0 : i32
    %c0_i32_0 = arith.constant 0 : i32
    return %arg0, %c0_i32 : i32, i32
  }
  func.func @transform_4(%arg0: i32) -> (i32, i32) {
    %c0_i32 = arith.constant 0 : i32
    %c0_i32_0 = arith.constant 0 : i32
    return %arg0, %c0_i32 : i32, i32
  }
  func.func @transform_5(%arg0: i32) -> (i32, i32) {
    %c0_i32 = arith.constant 0 : i32
    %c0_i32_0 = arith.constant 0 : i32
    return %arg0, %c0_i32 : i32, i32
  }
  func.func @transform_6(%arg0: i32) -> (i32, i32) {
    %c0_i32 = arith.constant 0 : i32
    %c0_i32_0 = arith.constant 0 : i32
    return %arg0, %c0_i32 : i32, i32
  }
  func.func @transform_7(%arg0: i32) -> (i32, i32) {
    %c0_i32 = arith.constant 0 : i32
    %c0_i32_0 = arith.constant 0 : i32
    return %arg0, %c0_i32 : i32, i32
  }
  func.func @transform_8(%arg0: i32) -> (i32, i32) {
    %c0_i32 = arith.constant 0 : i32
    %c0_i32_0 = arith.constant 0 : i32
    return %arg0, %c0_i32 : i32, i32
  }
}

</mosaic_0001>

<llo_original>
// kernel: miss_augmenter_forward.1
$region0: #{miss_augmenter_forward.1}
  #allocation0 [shape = 'u32[]', space=smem, size = 0x4, offset = 0x4, fixed_abs, tag = 'smem constant byte address 0x4 - core index']
  #allocation1 [shape = 'u32[72,128]{1,0:T(1,128)}', space=vmem, size = 0x9000, scoped, tag = 'internal scratch']
  %s0 = inlined_call_operand.vmem [shape: f32[16,128], index: 0, kind: input, shape index: {}]
  %s1 = inlined_call_operand.vmem [shape: f32[16,128], index: 1, kind: input, shape index: {}]
  %s2 = inlined_call_operand.vmem [shape: f32[16,128], index: 2, kind: input, shape index: {}]
  %s3 = inlined_call_operand.vmem [shape: f32[16,1], index: 3, kind: input, shape index: {}]
  %s4 = inlined_call_operand.vmem [shape: f32[16,1], index: 4, kind: input, shape index: {}]
  %s5 = inlined_call_operand.vmem [shape: f32[16,1], index: 5, kind: input, shape index: {}]
  %s6 = inlined_call_operand.vmem [shape: f32[16,128], index: 6, kind: output, shape index: {0}]
  %s7 = inlined_call_operand.vmem [shape: f32[16,128], index: 7, kind: output, shape index: {1}]
  %s8 = inlined_call_operand.vmem [shape: f32[16,128], index: 8, kind: output, shape index: {2}]
  %9 = xla_tuple %s6, %s7, %s8
  %s10 = sld [smem:[#allocation0]]
  $region50: #{miss_augmenter_forward.1} parent=0
    _
  %s12 = ssub.s32 1, %s10
  %s13 = scalar_select 0, %s12, %s10
  // Predicated region
  $region2: #{miss_augmenter_forward.1} parent=0 // pred_check
    _
  $region3: #{miss_augmenter_forward.1} parent=0 // pred_check_branch
    %15 = sbr.rel (0) target = $region5
  $region4: #{miss_augmenter_forward.1} parent=0 // pred_region
    _
  $region5: #{miss_augmenter_forward.1} parent=0 // pred_fallthru
    _
  // Predicated region
  $region6: #{miss_augmenter_forward.1} parent=0 // pred_check
    _
  $region7: #{miss_augmenter_forward.1} parent=0 // pred_check_branch
    %17 = sbr.rel (0) target = $region9
  $region8: #{miss_augmenter_forward.1} parent=0 // pred_region
    _
  $region9: #{miss_augmenter_forward.1} parent=0 // pred_fallthru
    _
  // Predicated region
  $region10: #{miss_augmenter_forward.1} parent=0 // pred_check
    _
  $region11: #{miss_augmenter_forward.1} parent=0 // pred_check_branch
    %19 = sbr.rel (0) target = $region13
  $region12: #{miss_augmenter_forward.1} parent=0 // pred_region
    _
  $region13: #{miss_augmenter_forward.1} parent=0 // pred_fallthru
    _
  // Predicated region
  $region14: #{miss_augmenter_forward.1} parent=0 // pred_check
    _
  $region15: #{miss_augmenter_forward.1} parent=0 // pred_check_branch
    %21 = sbr.rel (0) target = $region17
  $region16: #{miss_augmenter_forward.1} parent=0 // pred_region
    _
  $region17: #{miss_augmenter_forward.1} parent=0 // pred_fallthru
    _
  // Predicated region
  $region18: #{miss_augmenter_forward.1} parent=0 // pred_check
    _
  $region19: #{miss_augmenter_forward.1} parent=0 // pred_check_branch
    %23 = sbr.rel (0) target = $region21
  $region20: #{miss_augmenter_forward.1} parent=0 // pred_region
    _
  $region21: #{miss_augmenter_forward.1} parent=0 // pred_fallthru
    _
  // Predicated region
  $region22: #{miss_augmenter_forward.1} parent=0 // pred_check
    _
  $region23: #{miss_augmenter_forward.1} parent=0 // pred_check_branch
    %25 = sbr.rel (0) target = $region25
  $region24: #{miss_augmenter_forward.1} parent=0 // pred_region
    _
  $region25: #{miss_augmenter_forward.1} parent=0 // pred_fallthru
    _
  %v26 = vld [vmem:[%s0] sm:$0xff]
  %v27 = vld [vmem:[%s0 + $0x8] sm:$0xff]
  %v28 = vld [vmem:[%s3] sm:$0xff]
  %v29 = vld [vmem:[%s3 + $0x8] sm:$0xff]
  %31 = vset.pattern.permute.xlu0 0
  %32 = vperm.xlu0 %31, %v28
  %v33 = vpop.permute.xlu0 %32
  %36 = vset.pattern.permute.xlu0 0
  %37 = vperm.xlu0 %36, %v29
  %v38 = vpop.permute.xlu0 %37
  %v40 = vmul.f32 %v26, %v33
  %v41 = vmul.f32 %v27, %v38
  %42 = vst [vmem:[%s6] sm:$0xff] %v40
  %43 = vst [vmem:[%s6 + $0x8] sm:$0xff] %v41
  %v44 = vld [vmem:[%s1] sm:$0xff]
  %v45 = vld [vmem:[%s1 + $0x8] sm:$0xff]
  %v46 = vld [vmem:[%s4] sm:$0xff]
  %v47 = vld [vmem:[%s4 + $0x8] sm:$0xff]
  %49 = vset.pattern.permute.xlu0 0
  %50 = vperm.xlu0 %49, %v46
  %v51 = vpop.permute.xlu0 %50
  %54 = vset.pattern.permute.xlu0 0
  %55 = vperm.xlu0 %54, %v47
  %v56 = vpop.permute.xlu0 %55
  %v58 = vmul.f32 %v44, %v51
  %v59 = vmul.f32 %v45, %v56
  %60 = vst [vmem:[%s7] sm:$0xff] %v58
  %61 = vst [vmem:[%s7 + $0x8] sm:$0xff] %v59
  %v62 = vld [vmem:[%s2] sm:$0xff]
  %v63 = vld [vmem:[%s2 + $0x8] sm:$0xff]
  %v64 = vld [vmem:[%s5] sm:$0xff]
  %v65 = vld [vmem:[%s5 + $0x8] sm:$0xff]
  %67 = vset.pattern.permute.xlu0 0
  %68 = vperm.xlu0 %67, %v64
  %v69 = vpop.permute.xlu0 %68
  %72 = vset.pattern.permute.xlu0 0
  %73 = vperm.xlu0 %72, %v65
  %v74 = vpop.permute.xlu0 %73
  %v76 = vmul.f32 %v62, %v69
  %v77 = vmul.f32 %v63, %v74
  %78 = vst [vmem:[%s8] sm:$0xff] %v76
  %79 = vst [vmem:[%s8 + $0x8] sm:$0xff] %v77
  // Predicated region
  $region26: #{miss_augmenter_forward.1} parent=0 // pred_check
    _
  $region27: #{miss_augmenter_forward.1} parent=0 // pred_check_branch
    %81 = sbr.rel (0) target = $region29
  $region28: #{miss_augmenter_forward.1} parent=0 // pred_region
    _
  $region29: #{miss_augmenter_forward.1} parent=0 // pred_fallthru
    _
  // Predicated region
  $region30: #{miss_augmenter_forward.1} parent=0 // pred_check
    _
  $region31: #{miss_augmenter_forward.1} parent=0 // pred_check_branch
    %83 = sbr.rel (0) target = $region33
  $region32: #{miss_augmenter_forward.1} parent=0 // pred_region
    _
  $region33: #{miss_augmenter_forward.1} parent=0 // pred_fallthru
    _
  // Predicated region
  $region34: #{miss_augmenter_forward.1} parent=0 // pred_check
    _
  $region35: #{miss_augmenter_forward.1} parent=0 // pred_check_branch
    %85 = sbr.rel (0) target = $region37
  $region36: #{miss_augmenter_forward.1} parent=0 // pred_region
    _
  $region37: #{miss_augmenter_forward.1} parent=0 // pred_fallthru
    _
  // Predicated region
  $region38: #{miss_augmenter_forward.1} parent=0 // pred_check
    _
  $region39: #{miss_augmenter_forward.1} parent=0 // pred_check_branch
    %87 = sbr.rel (0) target = $region41
  $region40: #{miss_augmenter_forward.1} parent=0 // pred_region
    _
  $region41: #{miss_augmenter_forward.1} parent=0 // pred_fallthru
    _
  // Predicated region
  $region42: #{miss_augmenter_forward.1} parent=0 // pred_check
    _
  $region43: #{miss_augmenter_forward.1} parent=0 // pred_check_branch
    %89 = sbr.rel (0) target = $region45
  $region44: #{miss_augmenter_forward.1} parent=0 // pred_region
    _
  $region45: #{miss_augmenter_forward.1} parent=0 // pred_fallthru
    _
  // Predicated region
  $region46: #{miss_augmenter_forward.1} parent=0 // pred_check
    _
  $region47: #{miss_augmenter_forward.1} parent=0 // pred_check_branch
    %91 = sbr.rel (0) target = $region49
  $region48: #{miss_augmenter_forward.1} parent=0 // pred_region
    _
  $region49: #{miss_augmenter_forward.1} parent=0 // pred_fallthru
    _

</llo_original>
